<compile_context>
chip_gen: v7x
topology: tpu7x:2x2x1
jax: 0.10.0
libtpu: 0.0.40
codegen_flags: <defaults>
</compile_context>

<pallas_src>
import math
import jax
import jax.numpy as jnp
from jax.experimental import pallas as pl
from jax.experimental.pallas import tpu as pltpu


def _bigcn_kernel(text_ref, adj1_ref, adj2_ref,
                  w_ref, w2_ref, w3a_ref, w3b_ref,
                  b_ref, b2_ref, b3_ref,
                  out_ref):
    # Block shapes:
    #   text: (Bt, N, F_in) bf16     adj*: (Bt, N, N) bf16
    #   w/w2: (F_in, F_out) bf16     w3a/w3b: (F_out, F_out) bf16
    #   b*:   (1, 1, F_out) f32      out: (Bt, N, F_out)
    text = text_ref[...]
    adj1 = adj1_ref[...]
    adj2 = adj2_ref[...]
    bt = text.shape[0]

    # Broadcast the (small) weights along the fused-batch dim so every matmul
    # is a plain batched MXU dot (no rank-3 x rank-2 contractions, no reshape).
    w = jnp.broadcast_to(w_ref[...], (bt,) + tuple(w_ref.shape))
    w2 = jnp.broadcast_to(w2_ref[...], (bt,) + tuple(w2_ref.shape))
    w3a = jnp.broadcast_to(w3a_ref[...], (bt,) + tuple(w3a_ref.shape))
    w3b = jnp.broadcast_to(w3b_ref[...], (bt,) + tuple(w3b_ref.shape))
    b = b_ref[...]          # (1, 1, F_out) f32
    b2 = b2_ref[...]
    b3 = b3_ref[...]

    # Dense projections: bf16 operands, f32 accumulation on the MXU.
    hidden = jnp.einsum('bnk,bkf->bnf', text, w,
                        preferred_element_type=jnp.float32)    # (Bt, N, F_out) f32
    hidden2 = jnp.einsum('bnk,bkf->bnf', text, w2,
                         preferred_element_type=jnp.float32)

    # Degree normalization: row-sum in f32, approximate reciprocal on the EUP.
    denom1 = jnp.sum(adj1.astype(jnp.float32), axis=-1, keepdims=True) + 1.0
    denom2 = jnp.sum(adj2.astype(jnp.float32), axis=-1, keepdims=True) + 1.0
    inv1 = pl.reciprocal(denom1, approx=True)                  # (Bt, N, 1)
    inv2 = pl.reciprocal(denom2, approx=True)

    # Neighborhood aggregation (batched MXU dots, bf16 operands / f32 acc).
    agg1 = jnp.einsum('bnm,bmf->bnf', adj1, hidden.astype(adj1.dtype),
                      preferred_element_type=jnp.float32)
    agg2 = jnp.einsum('bnm,bmf->bnf', adj2, hidden2.astype(adj2.dtype),
                      preferred_element_type=jnp.float32)

    out1 = jnp.maximum(agg1 * inv1 + b, 0.0) + hidden           # relu + residual
    out2 = jnp.maximum(agg2 * inv2 + b2, 0.0) + hidden2
    # dropout(p=0.1) in eval mode == identity.

    # Final projection without concatenation: cat([o1, o2]) @ W3
    #   == o1 @ W3[:F_out] + o2 @ W3[F_out:]
    out3 = jnp.einsum('bnf,bfg->bng', out1.astype(w3a.dtype), w3a,
                      preferred_element_type=jnp.float32)
    out3 = out3 + jnp.einsum('bnf,bfg->bng', out2.astype(w3b.dtype), w3b,
                             preferred_element_type=jnp.float32)

    out_ref[...] = (out3 + b3).astype(out_ref.dtype)


def bigraph_convolution(text, adj1, adj2, weight, weight2, weight3,
                        bias, bias2, bias3, *, block_b=None):
    B, N, F_in = text.shape
    F_out = weight.shape[1]
    out_dtype = text.dtype

    if block_b is None:
        # Largest divisor of B that is <= 8: amortizes per-grid-step overhead
        # while leaving multiple "parallel" steps for megacore once B > 8.
        block_b = max(d for d in range(1, min(B, 8) + 1) if B % d == 0)
    assert B % block_b == 0
    num_blocks = B // block_b

    # bf16 operands for the MXU; biases stay f32 (added post-accumulation).
    cdt = jnp.bfloat16
    text_c = text.astype(cdt)
    adj1_c = adj1.astype(cdt)
    adj2_c = adj2.astype(cdt)
    w_c = weight.astype(cdt)
    w2_c = weight2.astype(cdt)
    w3a = weight3[:F_out].astype(cdt)        # (F_out, F_out)
    w3b = weight3[F_out:].astype(cdt)        # (F_out, F_out)
    b = bias.reshape(1, 1, F_out).astype(jnp.float32)
    b2 = bias2.reshape(1, 1, F_out).astype(jnp.float32)
    b3 = bias3.reshape(1, 1, F_out).astype(jnp.float32)

    def batch_map(i):
        return (i, 0, 0)

    def full2_map(i):
        return (0, 0)

    def full3_map(i):
        return (0, 0, 0)

    grid_spec = pl.GridSpec(
        grid=(num_blocks,),
        in_specs=[
            pl.BlockSpec((block_b, N, F_in), batch_map),   # text
            pl.BlockSpec((block_b, N, N), batch_map),      # adj1
            pl.BlockSpec((block_b, N, N), batch_map),      # adj2
            pl.BlockSpec((F_in, F_out), full2_map),        # weight
            pl.BlockSpec((F_in, F_out), full2_map),        # weight2
            pl.BlockSpec((F_out, F_out), full2_map),       # weight3[:F_out]
            pl.BlockSpec((F_out, F_out), full2_map),       # weight3[F_out:]
            pl.BlockSpec((1, 1, F_out), full3_map),        # bias
            pl.BlockSpec((1, 1, F_out), full3_map),        # bias2
            pl.BlockSpec((1, 1, F_out), full3_map),        # bias3
        ],
        out_specs=pl.BlockSpec((block_b, N, F_out), batch_map),
    )

    return pl.pallas_call(
        _bigcn_kernel,
        out_shape=jax.ShapeDtypeStruct((B, N, F_out), out_dtype),
        grid_spec=grid_spec,
        compiler_params=pltpu.CompilerParams(
            dimension_semantics=("parallel",),
            # Safe across v5e/v6e (128 MiB physical) and v7x (64 MiB physical);
            # lifts v5e's 16 MiB default scoped limit so moderate N still
            # double-buffers cleanly.
            vmem_limit_bytes=64 * 1024 * 1024,
        ),
    )(text_c, adj1_c, adj2_c, w_c, w2_c, w3a, w3b, b, b2, b3)


def _xavier_uniform(key, shape, dtype=jnp.float32):
    fan_in, fan_out = shape
    limit = math.sqrt(6.0 / (fan_in + fan_out))
    return jax.random.uniform(key, shape, dtype, minval=-limit, maxval=limit)


def _bias_uniform(key, n, dtype=jnp.float32):
    stdv = 1.0 / math.sqrt(n)
    return jax.random.uniform(key, (n,), dtype, minval=-stdv, maxval=stdv)


if __name__ == "__main__":
    B, N, F_in, F_out = 2, 8, 32, 32

    key = jax.random.PRNGKey(0)
    keys = jax.random.split(key, 9)

    # Deterministic parameter init (shapes per module __init__).
    weight = _xavier_uniform(keys[0], (F_in, F_out))
    weight2 = _xavier_uniform(keys[1], (F_in, F_out))
    weight3 = _xavier_uniform(keys[2], (2 * F_out, F_out))
    bias = _bias_uniform(keys[3], F_out)
    bias2 = _bias_uniform(keys[4], F_out)
    bias3 = _bias_uniform(keys[5], F_out)

    # Example inputs.
    text = jax.random.normal(keys[6], (B, N, F_in), dtype=jnp.float32)
    adj1 = (jax.random.uniform(keys[7], (B, N, N)) > 0.5).astype(jnp.float32)
    adj2 = (jax.random.uniform(keys[8], (B, N, N)) > 0.5).astype(jnp.float32)

    out = bigraph_convolution(text, adj1, adj2,
                              weight, weight2, weight3,
                              bias, bias2, bias3)
    out = jax.block_until_ready(out)

    # Pure-JAX reference (eval-mode dropout = identity).  Inputs are rounded to
    # bf16 to mirror the kernel's MXU operand precision; math stays f32.
    bf = lambda x: x.astype(jnp.bfloat16).astype(jnp.float32)
    t, a1, a2 = bf(text), bf(adj1), bf(adj2)
    w, w2, w3 = bf(weight), bf(weight2), bf(weight3)
    hidden = t @ w
    hidden2 = t @ w2
    denom1 = jnp.sum(a1, axis=2, keepdims=True) + 1.0
    denom2 = jnp.sum(a2, axis=2, keepdims=True) + 1.0
    o1 = jax.nn.relu(jnp.matmul(a1, hidden) / denom1 + bias) + hidden
    o2 = jax.nn.relu(jnp.matmul(a2, hidden2) / denom2 + bias2) + hidden2
    ref = jnp.concatenate([o1, o2], axis=-1) @ w3 + bias3

    assert out.shape == (B, N, F_out)
    assert out.dtype == text.dtype
    # bf16 intermediates + approx reciprocal => loosened tolerance vs f32 ref.
    assert jnp.allclose(out, ref, atol=5e-2, rtol=5e-2), "mismatch vs reference"

    print("KERNEL_OK")
</pallas_src>

<mosaic_0001>
module attributes {stable_mosaic.version = 11 : i64} {
  func.func @_bigcn_kernel(%arg0: i32, %arg1: memref<2x8x32xbf16, #tpu.memory_space<vmem>>, %arg2: memref<2x8x8xbf16, #tpu.memory_space<vmem>>, %arg3: memref<2x8x8xbf16, #tpu.memory_space<vmem>>, %arg4: memref<32x32xbf16, #tpu.memory_space<vmem>>, %arg5: memref<32x32xbf16, #tpu.memory_space<vmem>>, %arg6: memref<32x32xbf16, #tpu.memory_space<vmem>>, %arg7: memref<32x32xbf16, #tpu.memory_space<vmem>>, %arg8: memref<1x1x32xf32, #tpu.memory_space<vmem>>, %arg9: memref<1x1x32xf32, #tpu.memory_space<vmem>>, %arg10: memref<1x1x32xf32, #tpu.memory_space<vmem>>, %arg11: memref<2x8x32xf32, #tpu.memory_space<vmem>>) attributes {dimension_semantics = [#tpu.dimension_semantics<parallel>], iteration_bounds = array<i64: 1>, scalar_prefetch = 0 : i64, scratch_operands = 0 : i64, tpu.core_type = #tpu.core_type<tc>, window_params = [{transform_indices = @transform_0, window_bounds = array<i64: 2, 8, 32>}, {transform_indices = @transform_1, window_bounds = array<i64: 2, 8, 8>}, {transform_indices = @transform_2, window_bounds = array<i64: 2, 8, 8>}, {pipeline_mode = #tpu.pipeline_mode<synchronous>, transform_indices = @transform_3, window_bounds = array<i64: 32, 32>}, {pipeline_mode = #tpu.pipeline_mode<synchronous>, transform_indices = @transform_4, window_bounds = array<i64: 32, 32>}, {pipeline_mode = #tpu.pipeline_mode<synchronous>, transform_indices = @transform_5, window_bounds = array<i64: 32, 32>}, {pipeline_mode = #tpu.pipeline_mode<synchronous>, transform_indices = @transform_6, window_bounds = array<i64: 32, 32>}, {pipeline_mode = #tpu.pipeline_mode<synchronous>, transform_indices = @transform_7, window_bounds = array<i64: 1, 1, 32>}, {pipeline_mode = #tpu.pipeline_mode<synchronous>, transform_indices = @transform_8, window_bounds = array<i64: 1, 1, 32>}, {pipeline_mode = #tpu.pipeline_mode<synchronous>, transform_indices = @transform_9, window_bounds = array<i64: 1, 1, 32>}, {transform_indices = @transform_10, window_bounds = array<i64: 2, 8, 32>}]} {
    %c0 = arith.constant 0 : index
    %c0_0 = arith.constant 0 : index
    %c0_1 = arith.constant 0 : index
    %0 = vector.load %arg1[%c0, %c0_0, %c0_1] : memref<2x8x32xbf16, #tpu.memory_space<vmem>>, vector<2x8x32xbf16>
    %c0_2 = arith.constant 0 : index
    %c0_3 = arith.constant 0 : index
    %c0_4 = arith.constant 0 : index
    %1 = vector.load %arg2[%c0_2, %c0_3, %c0_4] : memref<2x8x8xbf16, #tpu.memory_space<vmem>>, vector<2x8x8xbf16>
    %c0_5 = arith.constant 0 : index
    %c0_6 = arith.constant 0 : index
    %c0_7 = arith.constant 0 : index
    %2 = vector.load %arg3[%c0_5, %c0_6, %c0_7] : memref<2x8x8xbf16, #tpu.memory_space<vmem>>, vector<2x8x8xbf16>
    %c0_8 = arith.constant 0 : index
    %c0_9 = arith.constant 0 : index
    %3 = vector.load %arg4[%c0_8, %c0_9] : memref<32x32xbf16, #tpu.memory_space<vmem>>, vector<32x32xbf16>
    %4 = vector.shape_cast %3 : vector<32x32xbf16> to vector<1x32x32xbf16>
    %5 = vector.broadcast %4 : vector<1x32x32xbf16> to vector<2x32x32xbf16>
    %c0_10 = arith.constant 0 : index
    %c0_11 = arith.constant 0 : index
    %6 = vector.load %arg5[%c0_10, %c0_11] : memref<32x32xbf16, #tpu.memory_space<vmem>>, vector<32x32xbf16>
    %7 = vector.shape_cast %6 : vector<32x32xbf16> to vector<1x32x32xbf16>
    %8 = vector.broadcast %7 : vector<1x32x32xbf16> to vector<2x32x32xbf16>
    %c0_12 = arith.constant 0 : index
    %c0_13 = arith.constant 0 : index
    %9 = vector.load %arg6[%c0_12, %c0_13] : memref<32x32xbf16, #tpu.memory_space<vmem>>, vector<32x32xbf16>
    %10 = vector.shape_cast %9 : vector<32x32xbf16> to vector<1x32x32xbf16>
    %11 = vector.broadcast %10 : vector<1x32x32xbf16> to vector<2x32x32xbf16>
    %c0_14 = arith.constant 0 : index
    %c0_15 = arith.constant 0 : index
    %12 = vector.load %arg7[%c0_14, %c0_15] : memref<32x32xbf16, #tpu.memory_space<vmem>>, vector<32x32xbf16>
    %13 = vector.shape_cast %12 : vector<32x32xbf16> to vector<1x32x32xbf16>
    %14 = vector.broadcast %13 : vector<1x32x32xbf16> to vector<2x32x32xbf16>
    %c0_16 = arith.constant 0 : index
    %c0_17 = arith.constant 0 : index
    %c0_18 = arith.constant 0 : index
    %15 = vector.load %arg8[%c0_16, %c0_17, %c0_18] : memref<1x1x32xf32, #tpu.memory_space<vmem>>, vector<1x1x32xf32>
    %c0_19 = arith.constant 0 : index
    %c0_20 = arith.constant 0 : index
    %c0_21 = arith.constant 0 : index
    %16 = vector.load %arg9[%c0_19, %c0_20, %c0_21] : memref<1x1x32xf32, #tpu.memory_space<vmem>>, vector<1x1x32xf32>
    %c0_22 = arith.constant 0 : index
    %c0_23 = arith.constant 0 : index
    %c0_24 = arith.constant 0 : index
    %17 = vector.load %arg10[%c0_22, %c0_23, %c0_24] : memref<1x1x32xf32, #tpu.memory_space<vmem>>, vector<1x1x32xf32>
    "tpu.trace_start"() <{level = 10 : i32, message = "bnk,bkf->bnf"}> : () -> ()
    %cst = arith.constant dense<0.000000e+00> : vector<2x8x32xf32>
    %18 = tpu.matmul %0, %5, %cst {dimension_numbers = #tpu.dot_dimension_numbers<[2], [1], [1], [2], [0, 0, 0, 1, 1, 2], [0], [0]>} : vector<2x8x32xbf16>, vector<2x32x32xbf16>, vector<2x8x32xf32> -> vector<2x8x32xf32>
    %cst_25 = arith.constant dense<0.000000e+00> : vector<2x8x32xf32>
    %19 = tpu.matmul %0, %8, %cst_25 {dimension_numbers = #tpu.dot_dimension_numbers<[2], [1], [1], [2], [0, 0, 0, 1, 1, 2], [0], [0]>} : vector<2x8x32xbf16>, vector<2x32x32xbf16>, vector<2x8x32xf32> -> vector<2x8x32xf32>
    "tpu.trace_stop"() : () -> ()
    %20 = arith.extf %1 : vector<2x8x8xbf16> to vector<2x8x8xf32>
    %cst_26 = arith.constant dense<0.000000e+00> : vector<2x8xf32>
    %21 = vector.multi_reduction <add>, %20, %cst_26 [2] : vector<2x8x8xf32> to vector<2x8xf32>
    %22 = vector.shape_cast %21 : vector<2x8xf32> to vector<2x8x1xf32>
    %cst_27 = arith.constant 1.000000e+00 : f32
    %23 = vector.broadcast %cst_27 : f32 to vector<2x8x1xf32>
    %24 = arith.addf %22, %23 : vector<2x8x1xf32>
    %25 = arith.extf %2 : vector<2x8x8xbf16> to vector<2x8x8xf32>
    %cst_28 = arith.constant dense<0.000000e+00> : vector<2x8xf32>
    %26 = vector.multi_reduction <add>, %25, %cst_28 [2] : vector<2x8x8xf32> to vector<2x8xf32>
    %27 = vector.shape_cast %26 : vector<2x8xf32> to vector<2x8x1xf32>
    %cst_29 = arith.constant 1.000000e+00 : f32
    %28 = vector.broadcast %cst_29 : f32 to vector<2x8x1xf32>
    %29 = arith.addf %27, %28 : vector<2x8x1xf32>
    %30 = tpu.reciprocal %24 {approx = true} : vector<2x8x1xf32> -> vector<2x8x1xf32>
    %31 = tpu.reciprocal %29 {approx = true} : vector<2x8x1xf32> -> vector<2x8x1xf32>
    %32 = arith.truncf %18 : vector<2x8x32xf32> to vector<2x8x32xbf16>
    "tpu.trace_start"() <{level = 10 : i32, message = "bnm,bmf->bnf"}> : () -> ()
    %cst_30 = arith.constant dense<0.000000e+00> : vector<2x8x32xf32>
    %33 = tpu.matmul %1, %32, %cst_30 {dimension_numbers = #tpu.dot_dimension_numbers<[2], [1], [1], [2], [0, 0, 0, 1, 1, 2], [0], [0]>} : vector<2x8x8xbf16>, vector<2x8x32xbf16>, vector<2x8x32xf32> -> vector<2x8x32xf32>
    "tpu.trace_stop"() : () -> ()
    %34 = arith.truncf %19 : vector<2x8x32xf32> to vector<2x8x32xbf16>
    "tpu.trace_start"() <{level = 10 : i32, message = "bnm,bmf->bnf"}> : () -> ()
    %cst_31 = arith.constant dense<0.000000e+00> : vector<2x8x32xf32>
    %35 = tpu.matmul %2, %34, %cst_31 {dimension_numbers = #tpu.dot_dimension_numbers<[2], [1], [1], [2], [0, 0, 0, 1, 1, 2], [0], [0]>} : vector<2x8x8xbf16>, vector<2x8x32xbf16>, vector<2x8x32xf32> -> vector<2x8x32xf32>
    "tpu.trace_stop"() : () -> ()
    %36 = vector.broadcast %30 : vector<2x8x1xf32> to vector<2x8x32xf32>
    %37 = arith.mulf %33, %36 : vector<2x8x32xf32>
    %38 = vector.broadcast %15 : vector<1x1x32xf32> to vector<2x8x32xf32>
    %39 = arith.addf %37, %38 : vector<2x8x32xf32>
    %cst_32 = arith.constant 0.000000e+00 : f32
    %40 = vector.broadcast %cst_32 : f32 to vector<2x8x32xf32>
    %41 = arith.maximumf %39, %40 : vector<2x8x32xf32>
    %42 = arith.addf %41, %18 : vector<2x8x32xf32>
    %43 = vector.broadcast %31 : vector<2x8x1xf32> to vector<2x8x32xf32>
    %44 = arith.mulf %35, %43 : vector<2x8x32xf32>
    %45 = vector.broadcast %16 : vector<1x1x32xf32> to vector<2x8x32xf32>
    %46 = arith.addf %44, %45 : vector<2x8x32xf32>
    %cst_33 = arith.constant 0.000000e+00 : f32
    %47 = vector.broadcast %cst_33 : f32 to vector<2x8x32xf32>
    %48 = arith.maximumf %46, %47 : vector<2x8x32xf32>
    %49 = arith.addf %48, %19 : vector<2x8x32xf32>
    %50 = arith.truncf %42 : vector<2x8x32xf32> to vector<2x8x32xbf16>
    "tpu.trace_start"() <{level = 10 : i32, message = "bnf,bfg->bng"}> : () -> ()
    %cst_34 = arith.constant dense<0.000000e+00> : vector<2x8x32xf32>
    %51 = tpu.matmul %50, %11, %cst_34 {dimension_numbers = #tpu.dot_dimension_numbers<[2], [1], [1], [2], [0, 0, 0, 1, 1, 2], [0], [0]>} : vector<2x8x32xbf16>, vector<2x32x32xbf16>, vector<2x8x32xf32> -> vector<2x8x32xf32>
    "tpu.trace_stop"() : () -> ()
    %52 = arith.truncf %49 : vector<2x8x32xf32> to vector<2x8x32xbf16>
    "tpu.trace_start"() <{level = 10 : i32, message = "bnf,bfg->bng"}> : () -> ()
    %cst_35 = arith.constant dense<0.000000e+00> : vector<2x8x32xf32>
    %53 = tpu.matmul %52, %14, %cst_35 {dimension_numbers = #tpu.dot_dimension_numbers<[2], [1], [1], [2], [0, 0, 0, 1, 1, 2], [0], [0]>} : vector<2x8x32xbf16>, vector<2x32x32xbf16>, vector<2x8x32xf32> -> vector<2x8x32xf32>
    "tpu.trace_stop"() : () -> ()
    %54 = arith.addf %51, %53 : vector<2x8x32xf32>
    %55 = vector.broadcast %17 : vector<1x1x32xf32> to vector<2x8x32xf32>
    %56 = arith.addf %54, %55 : vector<2x8x32xf32>
    %c0_36 = arith.constant 0 : index
    %c0_37 = arith.constant 0 : index
    %c0_38 = arith.constant 0 : index
    %57 = vector.load %arg11[%c0_36, %c0_37, %c0_38] : memref<2x8x32xf32, #tpu.memory_space<vmem>>, vector<2x8x32xf32>
    tpu.vector_store %arg11[%c0_36, %c0_37, %c0_38], %56 {strides = array<i32>} : memref<2x8x32xf32, #tpu.memory_space<vmem>>, vector<2x8x32xf32>,
    return
  }
  func.func @transform_0(%arg0: i32) -> (i32, i32, i32) {
    %c0_i32 = arith.constant 0 : i32
    %c0_i32_0 = arith.constant 0 : i32
    %c0_i32_1 = arith.constant 0 : i32
    return %arg0, %c0_i32, %c0_i32_0 : i32, i32, i32
  }
  func.func @transform_1(%arg0: i32) -> (i32, i32, i32) {
    %c0_i32 = arith.constant 0 : i32
    %c0_i32_0 = arith.constant 0 : i32
    %c0_i32_1 = arith.constant 0 : i32
    return %arg0, %c0_i32, %c0_i32_0 : i32, i32, i32
  }
  func.func @transform_2(%arg0: i32) -> (i32, i32, i32) {
    %c0_i32 = arith.constant 0 : i32
    %c0_i32_0 = arith.constant 0 : i32
    %c0_i32_1 = arith.constant 0 : i32
    return %arg0, %c0_i32, %c0_i32_0 : i32, i32, i32
  }
  func.func @transform_3(%arg0: i32) -> (i32, i32) {
    %c0_i32 = arith.constant 0 : i32
    %c0_i32_0 = arith.constant 0 : i32
    %c0_i32_1 = arith.constant 0 : i32
    return %c0_i32, %c0_i32_0 : i32, i32
  }
  func.func @transform_4(%arg0: i32) -> (i32, i32) {
    %c0_i32 = arith.constant 0 : i32
    %c0_i32_0 = arith.constant 0 : i32
    %c0_i32_1 = arith.constant 0 : i32
    return %c0_i32, %c0_i32_0 : i32, i32
  }
  func.func @transform_5(%arg0: i32) -> (i32, i32) {
    %c0_i32 = arith.constant 0 : i32
    %c0_i32_0 = arith.constant 0 : i32
    %c0_i32_1 = arith.constant 0 : i32
    return %c0_i32, %c0_i32_0 : i32, i32
  }
  func.func @transform_6(%arg0: i32) -> (i32, i32) {
    %c0_i32 = arith.constant 0 : i32
    %c0_i32_0 = arith.constant 0 : i32
    %c0_i32_1 = arith.constant 0 : i32
    return %c0_i32, %c0_i32_0 : i32, i32
  }
  func.func @transform_7(%arg0: i32) -> (i32, i32, i32) {
    %c0_i32 = arith.constant 0 : i32
    %c0_i32_0 = arith.constant 0 : i32
    %c0_i32_1 = arith.constant 0 : i32
    %c0_i32_2 = arith.constant 0 : i32
    return %c0_i32, %c0_i32_0, %c0_i32_1 : i32, i32, i32
  }
  func.func @transform_8(%arg0: i32) -> (i32, i32, i32) {
    %c0_i32 = arith.constant 0 : i32
    %c0_i32_0 = arith.constant 0 : i32
    %c0_i32_1 = arith.constant 0 : i32
    %c0_i32_2 = arith.constant 0 : i32
    return %c0_i32, %c0_i32_0, %c0_i32_1 : i32, i32, i32
  }
  func.func @transform_9(%arg0: i32) -> (i32, i32, i32) {
    %c0_i32 = arith.constant 0 : i32
    %c0_i32_0 = arith.constant 0 : i32
    %c0_i32_1 = arith.constant 0 : i32
    %c0_i32_2 = arith.constant 0 : i32
    return %c0_i32, %c0_i32_0, %c0_i32_1 : i32, i32, i32
  }
  func.func @transform_10(%arg0: i32) -> (i32, i32, i32) {
    %c0_i32 = arith.constant 0 : i32
    %c0_i32_0 = arith.constant 0 : i32
    %c0_i32_1 = arith.constant 0 : i32
    return %arg0, %c0_i32, %c0_i32_0 : i32, i32, i32
  }
}

</mosaic_0001>

<llo_original>
// kernel: tpu_custom_call.1
$region0: #{tpu_custom_call.1}
  #allocation0 [shape = 'u32[]', space=smem, size = 0x4, offset = 0x4, fixed_abs, tag = 'smem constant byte address 0x4 - core index']
  #allocation1 [shape = 'u32[144,128]{1,0:T(1,128)}', space=vmem, size = 0x12000, scoped, tag = 'internal scratch']
  %s0 = inlined_call_operand.hbm [shape: bf16[2,8,32], index: 0, kind: input, shape index: {}]
  %s1 = inlined_call_operand.hbm [shape: bf16[2,8,8], index: 1, kind: input, shape index: {}]
  %s2 = inlined_call_operand.hbm [shape: bf16[2,8,8], index: 2, kind: input, shape index: {}]
  %s3 = inlined_call_operand.hbm [shape: bf16[32,32], index: 3, kind: input, shape index: {}]
  %s4 = inlined_call_operand.hbm [shape: bf16[32,32], index: 4, kind: input, shape index: {}]
  %s5 = inlined_call_operand.hbm [shape: bf16[32,32], index: 5, kind: input, shape index: {}]
  %s6 = inlined_call_operand.hbm [shape: bf16[32,32], index: 6, kind: input, shape index: {}]
  %s7 = inlined_call_operand.hbm [shape: f32[1,1,32], index: 7, kind: input, shape index: {}]
  %s8 = inlined_call_operand.hbm [shape: f32[1,1,32], index: 8, kind: input, shape index: {}]
  %s9 = inlined_call_operand.hbm [shape: f32[1,1,32], index: 9, kind: input, shape index: {}]
  %s10 = inlined_call_operand.hbm [shape: f32[2,8,32], index: 10, kind: output, shape index: {}]
  %s11 = sld [smem:[#allocation0]]
  $region90: #{tpu_custom_call.1} parent=0
    _
  %s13 = ssub.s32 1, %s11
  %s14 = scalar_select 0, %s13, %s11
  $region1: #{tpu_custom_call.1} parent=0
    #allocation2 [shape = 'u8[4096]{0}', space=vmem, size = 0x1000, scoped, tag = 'input window, operand 0, single buffered']
    #allocation3 [shape = 's32[1]{0}', space=sflag, size = 0x4, scoped, tag = 'scoped memory for tpu_custom_call.1']
    #allocation4 [shape = 's32[1]{0}', space=sflag, size = 0x4, scoped, tag = 'scoped memory for tpu_custom_call.1']
    #allocation5 [shape = 'u8[4096]{0}', space=vmem, size = 0x1000, scoped, tag = 'input window, operand 1, single buffered']
    #allocation6 [shape = 's32[1]{0}', space=sflag, size = 0x4, scoped, tag = 'scoped memory for tpu_custom_call.1']
    #allocation7 [shape = 'u8[4096]{0}', space=vmem, size = 0x1000, scoped, tag = 'input window, operand 2, single buffered']
    #allocation8 [shape = 'u8[8192]{0}', space=vmem, size = 0x2000, scoped, tag = 'input window, operand 3, single buffered']
    #allocation9 [shape = 's32[1]{0}', space=sflag, size = 0x4, scoped, tag = 'scoped memory for tpu_custom_call.1']
    #allocation10 [shape = 'u8[8192]{0}', space=vmem, size = 0x2000, scoped, tag = 'input window, operand 4, single buffered']
    #allocation11 [shape = 'u8[8192]{0}', space=vmem, size = 0x2000, scoped, tag = 'input window, operand 5, single buffered']
    #allocation12 [shape = 's32[1]{0}', space=sflag, size = 0x4, scoped, tag = 'scoped memory for tpu_custom_call.1']
    #allocation13 [shape = 'u8[8192]{0}', space=vmem, size = 0x2000, scoped, tag = 'input window, operand 6, single buffered']
    #allocation14 [shape = 'u8[512]{0}', space=vmem, size = 0x400, scoped, tag = 'input window, operand 7, single buffered']
    #allocation15 [shape = 's32[1]{0}', space=sflag, size = 0x4, scoped, tag = 'scoped memory for tpu_custom_call.1']
    #allocation16 [shape = 'u8[512]{0}', space=vmem, size = 0x400, scoped, tag = 'input window, operand 8, single buffered']
    #allocation17 [shape = 'u8[512]{0}', space=vmem, size = 0x400, scoped, tag = 'input window, operand 9, single buffered']
    #allocation18 [shape = 's32[1]{0}', space=sflag, size = 0x4, scoped, tag = 'scoped memory for tpu_custom_call.1']
    #allocation19 [shape = 'u8[8192]{0}', space=vmem, size = 0x2000, scoped, tag = 'output window, operand 0, single buffered']
    %15 = vsyncpa [#allocation3], 0
    %16 = vsyncpa [#allocation6], 0
    %17 = vsyncpa [#allocation9], 0
    %18 = vsyncpa [#allocation12], 0
    %19 = vsyncpa [#allocation15], 0
    %20 = vsyncpa [#allocation18], 0
    %21 = vsyncpa [#allocation4], 0
    // Predicated region
    $region2: #{tpu_custom_call.1} parent=1 // pred_check
      _
    $region3: #{tpu_custom_call.1} parent=1 // pred_check_branch
      %23 = sbr.rel (0) target = $region5
    $region4: #{tpu_custom_call.1} parent=1 // pred_region
      %s25 = ssub.s32 128, 128
      %26 = vsyncadd [#allocation3], %s25
      %s27 = sshll.u32 [#allocation2], 4
      %s28 = int_to_ptr.vmem [resolvable:$true] %s27
      %33 = dma.hbm_to_vmem [thread:$0]  %s0, 128, %s28, [#allocation3], 64, 64, 4
    $region5: #{tpu_custom_call.1} parent=1 // pred_fallthru
      _
    // Predicated region
    $region6: #{tpu_custom_call.1} parent=1 // pred_check
      _
    $region7: #{tpu_custom_call.1} parent=1 // pred_check_branch
      %35 = sbr.rel (0) target = $region9
    $region8: #{tpu_custom_call.1} parent=1 // pred_region
      %s37 = ssub.s32 128, 128
      %38 = vsyncadd [#allocation6], %s37
      %s39 = sshll.u32 [#allocation5], 4
      %s40 = int_to_ptr.vmem [resolvable:$true] %s39
      %45 = dma.hbm_to_vmem [thread:$0]  %s1, 128, %s40, [#allocation6], 64, 64, 4
    $region9: #{tpu_custom_call.1} parent=1 // pred_fallthru
      _
    // Predicated region
    $region10: #{tpu_custom_call.1} parent=1 // pred_check
      _
    $region11: #{tpu_custom_call.1} parent=1 // pred_check_branch
      %47 = sbr.rel (0) target = $region13
    $region12: #{tpu_custom_call.1} parent=1 // pred_region
      %s49 = ssub.s32 128, 128
      %50 = vsyncadd [#allocation6], %s49
      %s51 = sshll.u32 [#allocation7], 4
      %s52 = int_to_ptr.vmem [resolvable:$true] %s51
      %57 = dma.hbm_to_vmem [thread:$0]  %s2, 128, %s52, [#allocation6], 64, 64, 4
    $region13: #{tpu_custom_call.1} parent=1 // pred_fallthru
      _
    // Predicated region
    $region14: #{tpu_custom_call.1} parent=1 // pred_check
      _
    $region15: #{tpu_custom_call.1} parent=1 // pred_check_branch
      %59 = sbr.rel (0) target = $region17
    $region16: #{tpu_custom_call.1} parent=1 // pred_region
      %s61 = ssub.s32 256, 256
      %62 = vsyncadd [#allocation9], %s61
      %s63 = sshll.u32 [#allocation8], 4
      %s64 = int_to_ptr.vmem [resolvable:$true] %s63
      %69 = dma.hbm_to_vmem [thread:$0]  %s3, 256, %s64, [#allocation9], 64, 64, 4
    $region17: #{tpu_custom_call.1} parent=1 // pred_fallthru
      _
    // Predicated region
    $region18: #{tpu_custom_call.1} parent=1 // pred_check
      _
    $region19: #{tpu_custom_call.1} parent=1 // pred_check_branch
      %71 = sbr.rel (0) target = $region21
    $region20: #{tpu_custom_call.1} parent=1 // pred_region
      %s73 = ssub.s32 256, 256
      %74 = vsyncadd [#allocation9], %s73
      %s75 = sshll.u32 [#allocation10], 4
      %s76 = int_to_ptr.vmem [resolvable:$true] %s75
      %81 = dma.hbm_to_vmem [thread:$0]  %s4, 256, %s76, [#allocation9], 64, 64, 4
    $region21: #{tpu_custom_call.1} parent=1 // pred_fallthru
      _
    // Predicated region
    $region22: #{tpu_custom_call.1} parent=1 // pred_check
      _
    $region23: #{tpu_custom_call.1} parent=1 // pred_check_branch
      %83 = sbr.rel (0) target = $region25
    $region24: #{tpu_custom_call.1} parent=1 // pred_region
      %s85 = ssub.s32 256, 256
      %86 = vsyncadd [#allocation12], %s85
      %s87 = sshll.u32 [#allocation11], 4
      %s88 = int_to_ptr.vmem [resolvable:$true] %s87
      %93 = dma.hbm_to_vmem [thread:$0]  %s5, 256, %s88, [#allocation12], 64, 64, 4
    $region25: #{tpu_custom_call.1} parent=1 // pred_fallthru
      _
    // Predicated region
    $region26: #{tpu_custom_call.1} parent=1 // pred_check
      _
    $region27: #{tpu_custom_call.1} parent=1 // pred_check_branch
      %95 = sbr.rel (0) target = $region29
    $region28: #{tpu_custom_call.1} parent=1 // pred_region
      %s97 = ssub.s32 256, 256
      %98 = vsyncadd [#allocation12], %s97
      %s99 = sshll.u32 [#allocation13], 4
      %s100 = int_to_ptr.vmem [resolvable:$true] %s99
      %105 = dma.hbm_to_vmem [thread:$0]  %s6, 256, %s100, [#allocation12], 64, 64, 4
    $region29: #{tpu_custom_call.1} parent=1 // pred_fallthru
      _
    // Predicated region
    $region30: #{tpu_custom_call.1} parent=1 // pred_check
      _
    $region31: #{tpu_custom_call.1} parent=1 // pred_check_branch
      %107 = sbr.rel (0) target = $region33
    $region32: #{tpu_custom_call.1} parent=1 // pred_region
      %s109 = ssub.s32 16, 16
      %110 = vsyncadd [#allocation15], %s109
      %s112 = sshll.u32 [#allocation14], 4
      %s113 = int_to_ptr.vmem [resolvable:$true] %s112
      %115 = dma.hbm_to_vmem [thread:$0]  %s7, 16, %s113, [#allocation15]
    $region33: #{tpu_custom_call.1} parent=1 // pred_fallthru
      _
    // Predicated region
    $region34: #{tpu_custom_call.1} parent=1 // pred_check
      _
    $region35: #{tpu_custom_call.1} parent=1 // pred_check_branch
      %117 = sbr.rel (0) target = $region37
    $region36: #{tpu_custom_call.1} parent=1 // pred_region
      %s119 = ssub.s32 16, 16
      %120 = vsyncadd [#allocation15], %s119
      %s122 = sshll.u32 [#allocation16], 4
      %s123 = int_to_ptr.vmem [resolvable:$true] %s122
      %125 = dma.hbm_to_vmem [thread:$0]  %s8, 16, %s123, [#allocation15]
    $region37: #{tpu_custom_call.1} parent=1 // pred_fallthru
      _
    // Predicated region
    $region38: #{tpu_custom_call.1} parent=1 // pred_check
      _
    $region39: #{tpu_custom_call.1} parent=1 // pred_check_branch
      %127 = sbr.rel (0) target = $region41
    $region40: #{tpu_custom_call.1} parent=1 // pred_region
      %s129 = ssub.s32 16, 16
      %130 = vsyncadd [#allocation18], %s129
      %s132 = sshll.u32 [#allocation17], 4
      %s133 = int_to_ptr.vmem [resolvable:$true] %s132
      %135 = dma.hbm_to_vmem [thread:$0]  %s9, 16, %s133, [#allocation18]
    $region41: #{tpu_custom_call.1} parent=1 // pred_fallthru
      _
    // Predicated region
    $region42: #{tpu_custom_call.1} parent=1 // pred_check
      _
    $region43: #{tpu_custom_call.1} parent=1 // pred_check_branch
      %137 = sbr.rel (0) target = $region45
    $region44: #{tpu_custom_call.1} parent=1 // pred_region
      %138 = dma.done [#allocation3], 128
    $region45: #{tpu_custom_call.1} parent=1 // pred_fallthru
      _
    // Predicated region
    $region46: #{tpu_custom_call.1} parent=1 // pred_check
      _
    $region47: #{tpu_custom_call.1} parent=1 // pred_check_branch
      %140 = sbr.rel (0) target = $region49
    $region48: #{tpu_custom_call.1} parent=1 // pred_region
      %141 = dma.done [#allocation6], 128
    $region49: #{tpu_custom_call.1} parent=1 // pred_fallthru
      _
    // Predicated region
    $region50: #{tpu_custom_call.1} parent=1 // pred_check
      _
    $region51: #{tpu_custom_call.1} parent=1 // pred_check_branch
      %143 = sbr.rel (0) target = $region53
    $region52: #{tpu_custom_call.1} parent=1 // pred_region
      %144 = dma.done [#allocation6], 128
    $region53: #{tpu_custom_call.1} parent=1 // pred_fallthru
      _
    // Predicated region
    $region54: #{tpu_custom_call.1} parent=1 // pred_check
      _
    $region55: #{tpu_custom_call.1} parent=1 // pred_check_branch
      %146 = sbr.rel (0) target = $region57
    $region56: #{tpu_custom_call.1} parent=1 // pred_region
      %147 = dma.done [#allocation9], 256
    $region57: #{tpu_custom_call.1} parent=1 // pred_fallthru
      _
    // Predicated region
    $region58: #{tpu_custom_call.1} parent=1 // pred_check
      _
    $region59: #{tpu_custom_call.1} parent=1 // pred_check_branch
      %149 = sbr.rel (0) target = $region61
    $region60: #{tpu_custom_call.1} parent=1 // pred_region
      %150 = dma.done [#allocation9], 256
    $region61: #{tpu_custom_call.1} parent=1 // pred_fallthru
      _
    // Predicated region
    $region62: #{tpu_custom_call.1} parent=1 // pred_check
      _
    $region63: #{tpu_custom_call.1} parent=1 // pred_check_branch
      %152 = sbr.rel (0) target = $region65
    $region64: #{tpu_custom_call.1} parent=1 // pred_region
      %153 = dma.done [#allocation12], 256
    $region65: #{tpu_custom_call.1} parent=1 // pred_fallthru
      _
    // Predicated region
    $region66: #{tpu_custom_call.1} parent=1 // pred_check
      _
    $region67: #{tpu_custom_call.1} parent=1 // pred_check_branch
      %155 = sbr.rel (0) target = $region69
    $region68: #{tpu_custom_call.1} parent=1 // pred_region
      %156 = dma.done [#allocation12], 256
    $region69: #{tpu_custom_call.1} parent=1 // pred_fallthru
      _
    // Predicated region
    $region70: #{tpu_custom_call.1} parent=1 // pred_check
      _
    $region71: #{tpu_custom_call.1} parent=1 // pred_check_branch
      %158 = sbr.rel (0) target = $region73
    $region72: #{tpu_custom_call.1} parent=1 // pred_region
      %159 = dma.done [#allocation15], 16
    $region73: #{tpu_custom_call.1} parent=1 // pred_fallthru
      _
    // Predicated region
    $region74: #{tpu_custom_call.1} parent=1 // pred_check
      _
    $region75: #{tpu_custom_call.1} parent=1 // pred_check_branch
      %161 = sbr.rel (0) target = $region77
    $region76: #{tpu_custom_call.1} parent=1 // pred_region
      %162 = dma.done [#allocation15], 16
    $region77: #{tpu_custom_call.1} parent=1 // pred_fallthru
      _
    // Predicated region
    $region78: #{tpu_custom_call.1} parent=1 // pred_check
      _
    $region79: #{tpu_custom_call.1} parent=1 // pred_check_branch
      %164 = sbr.rel (0) target = $region81
    $region80: #{tpu_custom_call.1} parent=1 // pred_region
      %165 = dma.done [#allocation18], 16
    $region81: #{tpu_custom_call.1} parent=1 // pred_fallthru
      _
    %v167 = vld [vmem:[#allocation2] sm:$0xf]
    %v168 = vld [vmem:[#allocation2 + $0x4] sm:$0xf]
    %v169 = vld [vmem:[#allocation5] sm:$0xf]
    %v170 = vld [vmem:[#allocation5 + $0x4] sm:$0xf]
    %v171 = vld [vmem:[#allocation7] sm:$0xf]
    %v172 = vld [vmem:[#allocation7 + $0x4] sm:$0xf]
    %v173 = vld [vmem:[#allocation8] sm:$0xf]
    %v174 = vld [vmem:[#allocation8 + $0x4] sm:$0xf]
    %v175 = vld [vmem:[#allocation8 + $0x8] sm:$0xf]
    %v176 = vld [vmem:[#allocation8 + $0xc] sm:$0xf]
    %v177 = vld [vmem:[#allocation10] sm:$0xf]
    %v178 = vld [vmem:[#allocation10 + $0x4] sm:$0xf]
    %v179 = vld [vmem:[#allocation10 + $0x8] sm:$0xf]
    %v180 = vld [vmem:[#allocation10 + $0xc] sm:$0xf]
    %v181 = vld [vmem:[#allocation11] sm:$0xf]
    %v182 = vld [vmem:[#allocation11 + $0x4] sm:$0xf]
    %v183 = vld [vmem:[#allocation11 + $0x8] sm:$0xf]
    %v184 = vld [vmem:[#allocation11 + $0xc] sm:$0xf]
    %v185 = vld [vmem:[#allocation13] sm:$0xf]
    %v186 = vld [vmem:[#allocation13 + $0x4] sm:$0xf]
    %v187 = vld [vmem:[#allocation13 + $0x8] sm:$0xf]
    %v188 = vld [vmem:[#allocation13 + $0xc] sm:$0xf]
    %v189 = vld [vmem:[#allocation14] sm:$0x1]
    %v190 = vld [vmem:[#allocation16] sm:$0x1]
    %v191 = vld [vmem:[#allocation17] sm:$0x1]
    %v196 = vunpack.c.l.b16 %v173
    %v197 = vunpack.c.l.b16 %v174
    %v198 = vunpack.c.l.b16 %v175
    %v199 = vunpack.c.l.b16 %v176
    %v200 = vpack.c.b16 %v197, %v196
    %v201 = vpack.c.b16 %v199, %v198
    %vm204 = vcmask 261120
    %v206 = vsel %vm204, %v167, 0
    %208 = vmatprep.subr.bf16.mxu0 0
    %209 = vmatpush1.bf16.msra.mxu0 %v200
    %210 = vmatprep.subr.bf16.mxu0 0
    %211 = vmatpush1.bf16.msra.mxu0 %v201
    %212 = vmatprep.subr.bf16.mxu0 0
    %213 = vmatpush1.bf16.msra.mxu0 0
    %214 = vmatprep.subr.bf16.mxu0 0
    %215 = vmatpush1.bf16.msra.mxu0 0
    %216 = vmatprep.subr.bf16.mxu0 0
    %217 = vmatpush1.bf16.msra.mxu0 0
    %218 = vmatprep.subr.bf16.mxu0 0
    %219 = vmatpush1.bf16.msra.mxu0 0
    %220 = vmatprep.subr.bf16.mxu0 0
    %221 = vmatpush1.bf16.msra.mxu0 0
    %222 = vmatprep.subr.bf16.mxu0 0
    %223 = vmatpush1.bf16.msra.mxu0 0
    %224 = vmatprep.subr.bf16.mxu0 0
    %225 = vmatpush1.bf16.msra.mxu0 0
    %226 = vmatprep.subr.bf16.mxu0 0
    %227 = vmatpush1.bf16.msra.mxu0 0
    %228 = vmatprep.subr.bf16.mxu0 0
    %229 = vmatpush1.bf16.msra.mxu0 0
    %230 = vmatprep.subr.bf16.mxu0 0
    %231 = vmatpush1.bf16.msra.mxu0 0
    %232 = vmatprep.subr.bf16.mxu0 0
    %233 = vmatpush1.bf16.msra.mxu0 0
    %234 = vmatprep.subr.bf16.mxu0 0
    %235 = vmatpush1.bf16.msra.mxu0 0
    %236 = vmatprep.subr.bf16.mxu0 0
    %237 = vmatpush1.bf16.msra.mxu0 0
    %238 = vmatprep.subr.bf16.mxu0 0
    %239 = vmatpush1.bf16.msra.mxu0 0
    %240 = vmatprep.mubr.bf16.mxu0 0
    %241 = vmatmul.mubr.bf16.gmra.mrb[0].mxu0 %v206
    %v242 = vpop.f32.mrb[0].mxu0
    %v243 = vadd.f32 0.0, %v242
    %v244 = vpop.f32.mrb[0].mxu0
    %v245 = vpop.f32.mrb[0].mxu0
    %v246 = vpop.f32.mrb[0].mxu0
    %247 = vdwg.mxu0
    %v249 = vsel %vm204, %v168, 0
    %251 = vmatprep.subr.bf16.mxu0 0
    %252 = vmatpush1.bf16.msra.mxu0 %v200
    %253 = vmatprep.subr.bf16.mxu0 0
    %254 = vmatpush1.bf16.msra.mxu0 %v201
    %255 = vmatprep.subr.bf16.mxu0 0
    %256 = vmatpush1.bf16.msra.mxu0 0
    %257 = vmatprep.subr.bf16.mxu0 0
    %258 = vmatpush1.bf16.msra.mxu0 0
    %259 = vmatprep.subr.bf16.mxu0 0
    %260 = vmatpush1.bf16.msra.mxu0 0
    %261 = vmatprep.subr.bf16.mxu0 0
    %262 = vmatpush1.bf16.msra.mxu0 0
    %263 = vmatprep.subr.bf16.mxu0 0
    %264 = vmatpush1.bf16.msra.mxu0 0
    %265 = vmatprep.subr.bf16.mxu0 0
    %266 = vmatpush1.bf16.msra.mxu0 0
    %267 = vmatprep.subr.bf16.mxu0 0
    %268 = vmatpush1.bf16.msra.mxu0 0
    %269 = vmatprep.subr.bf16.mxu0 0
    %270 = vmatpush1.bf16.msra.mxu0 0
    %271 = vmatprep.subr.bf16.mxu0 0
    %272 = vmatpush1.bf16.msra.mxu0 0
    %273 = vmatprep.subr.bf16.mxu0 0
    %274 = vmatpush1.bf16.msra.mxu0 0
    %275 = vmatprep.subr.bf16.mxu0 0
    %276 = vmatpush1.bf16.msra.mxu0 0
    %277 = vmatprep.subr.bf16.mxu0 0
    %278 = vmatpush1.bf16.msra.mxu0 0
    %279 = vmatprep.subr.bf16.mxu0 0
    %280 = vmatpush1.bf16.msra.mxu0 0
    %281 = vmatprep.subr.bf16.mxu0 0
    %282 = vmatpush1.bf16.msra.mxu0 0
    %283 = vmatprep.mubr.bf16.mxu0 0
    %284 = vmatmul.mubr.bf16.gmra.mrb[0].mxu0 %v249
    %v285 = vpop.f32.mrb[0].mxu0
    %v286 = vadd.f32 0.0, %v285
    %v287 = vpop.f32.mrb[0].mxu0
    %v288 = vpop.f32.mrb[0].mxu0
    %v289 = vpop.f32.mrb[0].mxu0
    %290 = vdwg.mxu0
    %v295 = vunpack.c.l.b16 %v177
    %v296 = vunpack.c.l.b16 %v178
    %v297 = vunpack.c.l.b16 %v179
    %v298 = vunpack.c.l.b16 %v180
    %v299 = vpack.c.b16 %v296, %v295
    %v300 = vpack.c.b16 %v298, %v297
    %303 = vmatprep.subr.bf16.mxu0 0
    %304 = vmatpush1.bf16.msra.mxu0 %v299
    %305 = vmatprep.subr.bf16.mxu0 0
    %306 = vmatpush1.bf16.msra.mxu0 %v300
    %307 = vmatprep.subr.bf16.mxu0 0
    %308 = vmatpush1.bf16.msra.mxu0 0
    %309 = vmatprep.subr.bf16.mxu0 0
    %310 = vmatpush1.bf16.msra.mxu0 0
    %311 = vmatprep.subr.bf16.mxu0 0
    %312 = vmatpush1.bf16.msra.mxu0 0
    %313 = vmatprep.subr.bf16.mxu0 0
    %314 = vmatpush1.bf16.msra.mxu0 0
    %315 = vmatprep.subr.bf16.mxu0 0
    %316 = vmatpush1.bf16.msra.mxu0 0
    %317 = vmatprep.subr.bf16.mxu0 0
    %318 = vmatpush1.bf16.msra.mxu0 0
    %319 = vmatprep.subr.bf16.mxu0 0
    %320 = vmatpush1.bf16.msra.mxu0 0
    %321 = vmatprep.subr.bf16.mxu0 0
    %322 = vmatpush1.bf16.msra.mxu0 0
    %323 = vmatprep.subr.bf16.mxu0 0
    %324 = vmatpush1.bf16.msra.mxu0 0
    %325 = vmatprep.subr.bf16.mxu0 0
    %326 = vmatpush1.bf16.msra.mxu0 0
    %327 = vmatprep.subr.bf16.mxu0 0
    %328 = vmatpush1.bf16.msra.mxu0 0
    %329 = vmatprep.subr.bf16.mxu0 0
    %330 = vmatpush1.bf16.msra.mxu0 0
    %331 = vmatprep.subr.bf16.mxu0 0
    %332 = vmatpush1.bf16.msra.mxu0 0
    %333 = vmatprep.subr.bf16.mxu0 0
    %334 = vmatpush1.bf16.msra.mxu0 0
    %335 = vmatprep.mubr.bf16.mxu0 0
    %336 = vmatmul.mubr.bf16.gmra.mrb[0].mxu0 %v206
    %v337 = vpop.f32.mrb[0].mxu0
    %v338 = vadd.f32 0.0, %v337
    %v339 = vpop.f32.mrb[0].mxu0
    %v340 = vpop.f32.mrb[0].mxu0
    %v341 = vpop.f32.mrb[0].mxu0
    %342 = vdwg.mxu0
    %343 = vmatprep.subr.bf16.mxu0 0
    %344 = vmatpush1.bf16.msra.mxu0 %v299
    %345 = vmatprep.subr.bf16.mxu0 0
    %346 = vmatpush1.bf16.msra.mxu0 %v300
    %347 = vmatprep.subr.bf16.mxu0 0
    %348 = vmatpush1.bf16.msra.mxu0 0
    %349 = vmatprep.subr.bf16.mxu0 0
    %350 = vmatpush1.bf16.msra.mxu0 0
    %351 = vmatprep.subr.bf16.mxu0 0
    %352 = vmatpush1.bf16.msra.mxu0 0
    %353 = vmatprep.subr.bf16.mxu0 0
    %354 = vmatpush1.bf16.msra.mxu0 0
    %355 = vmatprep.subr.bf16.mxu0 0
    %356 = vmatpush1.bf16.msra.mxu0 0
    %357 = vmatprep.subr.bf16.mxu0 0
    %358 = vmatpush1.bf16.msra.mxu0 0
    %359 = vmatprep.subr.bf16.mxu0 0
    %360 = vmatpush1.bf16.msra.mxu0 0
    %361 = vmatprep.subr.bf16.mxu0 0
    %362 = vmatpush1.bf16.msra.mxu0 0
    %363 = vmatprep.subr.bf16.mxu0 0
    %364 = vmatpush1.bf16.msra.mxu0 0
    %365 = vmatprep.subr.bf16.mxu0 0
    %366 = vmatpush1.bf16.msra.mxu0 0
    %367 = vmatprep.subr.bf16.mxu0 0
    %368 = vmatpush1.bf16.msra.mxu0 0
    %369 = vmatprep.subr.bf16.mxu0 0
    %370 = vmatpush1.bf16.msra.mxu0 0
    %371 = vmatprep.subr.bf16.mxu0 0
    %372 = vmatpush1.bf16.msra.mxu0 0
    %373 = vmatprep.subr.bf16.mxu0 0
    %374 = vmatpush1.bf16.msra.mxu0 0
    %375 = vmatprep.mubr.bf16.mxu0 0
    %376 = vmatmul.mubr.bf16.gmra.mrb[0].mxu0 %v249
    %v377 = vpop.f32.mrb[0].mxu0
    %v378 = vadd.f32 0.0, %v377
    %v379 = vpop.f32.mrb[0].mxu0
    %v380 = vpop.f32.mrb[0].mxu0
    %v381 = vpop.f32.mrb[0].mxu0
    %382 = vdwg.mxu0
    %v383 = vunpack.c.l.bf16 %v169
    %v384 = vunpack.c.l.bf16 %v170
    %vm385 = vcmask 64512
    %v386 = vsel %vm385, %v383, 0.0
    %387 = vadd.xlane.f32.xlu0 %v386
    %v388 = vpop.xlane.xlu0 %387
    %v389 = vsel %vm385, %v384, 0.0
    %390 = vadd.xlane.f32.xlu0 %v389
    %v391 = vpop.xlane.xlu0 %390
    %v392 = vadd.f32 %v388, 1.0
    %v393 = vadd.f32 %v391, 1.0
    %v394 = vunpack.c.l.bf16 %v171
    %v395 = vunpack.c.l.bf16 %v172
    %v396 = vsel %vm385, %v394, 0.0
    %397 = vadd.xlane.f32.xlu0 %v396
    %v398 = vpop.xlane.xlu0 %397
    %v399 = vsel %vm385, %v395, 0.0
    %400 = vadd.xlane.f32.xlu0 %v399
    %v401 = vpop.xlane.xlu0 %400
    %v402 = vadd.f32 %v398, 1.0
    %v403 = vadd.f32 %v401, 1.0
    %v404 = vrcp.pop %v392
    %v405 = vrcp.pop %v393
    %v406 = vrcp.pop %v402
    %v407 = vrcp.pop %v403
    %v408 = vpack.c.bf16 %v243, %v243
    %v409 = vpack.c.bf16 %v286, %v286
    %v411 = vsel %vm385, %v169, 0
    %vm413 = vcmask 1043456
    %v415 = vsel %vm413, %v408, 0
    %417 = vmatprep.subr.bf16.mxu0 0
    %418 = vmatpush1.bf16.msra.mxu0 %v415
    %419 = vmatprep.subr.bf16.mxu0 0
    %420 = vmatpush1.bf16.msra.mxu0 0
    %421 = vmatprep.subr.bf16.mxu0 0
    %422 = vmatpush1.bf16.msra.mxu0 0
    %423 = vmatprep.subr.bf16.mxu0 0
    %424 = vmatpush1.bf16.msra.mxu0 0
    %425 = vmatprep.subr.bf16.mxu0 0
    %426 = vmatpush1.bf16.msra.mxu0 0
    %427 = vmatprep.subr.bf16.mxu0 0
    %428 = vmatpush1.bf16.msra.mxu0 0
    %429 = vmatprep.subr.bf16.mxu0 0
    %430 = vmatpush1.bf16.msra.mxu0 0
    %431 = vmatprep.subr.bf16.mxu0 0
    %432 = vmatpush1.bf16.msra.mxu0 0
    %433 = vmatprep.subr.bf16.mxu0 0
    %434 = vmatpush1.bf16.msra.mxu0 0
    %435 = vmatprep.subr.bf16.mxu0 0
    %436 = vmatpush1.bf16.msra.mxu0 0
    %437 = vmatprep.subr.bf16.mxu0 0
    %438 = vmatpush1.bf16.msra.mxu0 0
    %439 = vmatprep.subr.bf16.mxu0 0
    %440 = vmatpush1.bf16.msra.mxu0 0
    %441 = vmatprep.subr.bf16.mxu0 0
    %442 = vmatpush1.bf16.msra.mxu0 0
    %443 = vmatprep.subr.bf16.mxu0 0
    %444 = vmatpush1.bf16.msra.mxu0 0
    %445 = vmatprep.subr.bf16.mxu0 0
    %446 = vmatpush1.bf16.msra.mxu0 0
    %447 = vmatprep.subr.bf16.mxu0 0
    %448 = vmatpush1.bf16.msra.mxu0 0
    %449 = vmatprep.mubr.bf16.mxu0 0
    %450 = vmatmul.mubr.bf16.gmra.mrb[0].mxu0 %v411
    %v451 = vpop.f32.mrb[0].mxu0
    %v452 = vadd.f32 0.0, %v451
    %v453 = vpop.f32.mrb[0].mxu0
    %v454 = vpop.f32.mrb[0].mxu0
    %v455 = vpop.f32.mrb[0].mxu0
    %456 = vdwg.mxu0
    %v458 = vsel %vm385, %v170, 0
    %v461 = vsel %vm413, %v409, 0
    %463 = vmatprep.subr.bf16.mxu0 0
    %464 = vmatpush1.bf16.msra.mxu0 %v461
    %465 = vmatprep.subr.bf16.mxu0 0
    %466 = vmatpush1.bf16.msra.mxu0 0
    %467 = vmatprep.subr.bf16.mxu0 0
    %468 = vmatpush1.bf16.msra.mxu0 0
    %469 = vmatprep.subr.bf16.mxu0 0
    %470 = vmatpush1.bf16.msra.mxu0 0
    %471 = vmatprep.subr.bf16.mxu0 0
    %472 = vmatpush1.bf16.msra.mxu0 0
    %473 = vmatprep.subr.bf16.mxu0 0
    %474 = vmatpush1.bf16.msra.mxu0 0
    %475 = vmatprep.subr.bf16.mxu0 0
    %476 = vmatpush1.bf16.msra.mxu0 0
    %477 = vmatprep.subr.bf16.mxu0 0
    %478 = vmatpush1.bf16.msra.mxu0 0
    %479 = vmatprep.subr.bf16.mxu0 0
    %480 = vmatpush1.bf16.msra.mxu0 0
    %481 = vmatprep.subr.bf16.mxu0 0
    %482 = vmatpush1.bf16.msra.mxu0 0
    %483 = vmatprep.subr.bf16.mxu0 0
    %484 = vmatpush1.bf16.msra.mxu0 0
    %485 = vmatprep.subr.bf16.mxu0 0
    %486 = vmatpush1.bf16.msra.mxu0 0
    %487 = vmatprep.subr.bf16.mxu0 0
    %488 = vmatpush1.bf16.msra.mxu0 0
    %489 = vmatprep.subr.bf16.mxu0 0
    %490 = vmatpush1.bf16.msra.mxu0 0
    %491 = vmatprep.subr.bf16.mxu0 0
    %492 = vmatpush1.bf16.msra.mxu0 0
    %493 = vmatprep.subr.bf16.mxu0 0
    %494 = vmatpush1.bf16.msra.mxu0 0
    %495 = vmatprep.mubr.bf16.mxu0 0
    %496 = vmatmul.mubr.bf16.gmra.mrb[0].mxu0 %v458
    %v497 = vpop.f32.mrb[0].mxu0
    %v498 = vadd.f32 0.0, %v497
    %v499 = vpop.f32.mrb[0].mxu0
    %v500 = vpop.f32.mrb[0].mxu0
    %v501 = vpop.f32.mrb[0].mxu0
    %502 = vdwg.mxu0
    %v503 = vpack.c.bf16 %v338, %v338
    %v504 = vpack.c.bf16 %v378, %v378
    %v506 = vsel %vm385, %v171, 0
    %v509 = vsel %vm413, %v503, 0
    %511 = vmatprep.subr.bf16.mxu0 0
    %512 = vmatpush1.bf16.msra.mxu0 %v509
    %513 = vmatprep.subr.bf16.mxu0 0
    %514 = vmatpush1.bf16.msra.mxu0 0
    %515 = vmatprep.subr.bf16.mxu0 0
    %516 = vmatpush1.bf16.msra.mxu0 0
    %517 = vmatprep.subr.bf16.mxu0 0
    %518 = vmatpush1.bf16.msra.mxu0 0
    %519 = vmatprep.subr.bf16.mxu0 0
    %520 = vmatpush1.bf16.msra.mxu0 0
    %521 = vmatprep.subr.bf16.mxu0 0
    %522 = vmatpush1.bf16.msra.mxu0 0
    %523 = vmatprep.subr.bf16.mxu0 0
    %524 = vmatpush1.bf16.msra.mxu0 0
    %525 = vmatprep.subr.bf16.mxu0 0
    %526 = vmatpush1.bf16.msra.mxu0 0
    %527 = vmatprep.subr.bf16.mxu0 0
    %528 = vmatpush1.bf16.msra.mxu0 0
    %529 = vmatprep.subr.bf16.mxu0 0
    %530 = vmatpush1.bf16.msra.mxu0 0
    %531 = vmatprep.subr.bf16.mxu0 0
    %532 = vmatpush1.bf16.msra.mxu0 0
    %533 = vmatprep.subr.bf16.mxu0 0
    %534 = vmatpush1.bf16.msra.mxu0 0
    %535 = vmatprep.subr.bf16.mxu0 0
    %536 = vmatpush1.bf16.msra.mxu0 0
    %537 = vmatprep.subr.bf16.mxu0 0
    %538 = vmatpush1.bf16.msra.mxu0 0
    %539 = vmatprep.subr.bf16.mxu0 0
    %540 = vmatpush1.bf16.msra.mxu0 0
    %541 = vmatprep.subr.bf16.mxu0 0
    %542 = vmatpush1.bf16.msra.mxu0 0
    %543 = vmatprep.mubr.bf16.mxu0 0
    %544 = vmatmul.mubr.bf16.gmra.mrb[0].mxu0 %v506
    %v545 = vpop.f32.mrb[0].mxu0
    %v546 = vadd.f32 0.0, %v545
    %v547 = vpop.f32.mrb[0].mxu0
    %v548 = vpop.f32.mrb[0].mxu0
    %v549 = vpop.f32.mrb[0].mxu0
    %550 = vdwg.mxu0
    %v552 = vsel %vm385, %v172, 0
    %v555 = vsel %vm413, %v504, 0
    %557 = vmatprep.subr.bf16.mxu0 0
    %558 = vmatpush1.bf16.msra.mxu0 %v555
    %559 = vmatprep.subr.bf16.mxu0 0
    %560 = vmatpush1.bf16.msra.mxu0 0
    %561 = vmatprep.subr.bf16.mxu0 0
    %562 = vmatpush1.bf16.msra.mxu0 0
    %563 = vmatprep.subr.bf16.mxu0 0
    %564 = vmatpush1.bf16.msra.mxu0 0
    %565 = vmatprep.subr.bf16.mxu0 0
    %566 = vmatpush1.bf16.msra.mxu0 0
    %567 = vmatprep.subr.bf16.mxu0 0
    %568 = vmatpush1.bf16.msra.mxu0 0
    %569 = vmatprep.subr.bf16.mxu0 0
    %570 = vmatpush1.bf16.msra.mxu0 0
    %571 = vmatprep.subr.bf16.mxu0 0
    %572 = vmatpush1.bf16.msra.mxu0 0
    %573 = vmatprep.subr.bf16.mxu0 0
    %574 = vmatpush1.bf16.msra.mxu0 0
    %575 = vmatprep.subr.bf16.mxu0 0
    %576 = vmatpush1.bf16.msra.mxu0 0
    %577 = vmatprep.subr.bf16.mxu0 0
    %578 = vmatpush1.bf16.msra.mxu0 0
    %579 = vmatprep.subr.bf16.mxu0 0
    %580 = vmatpush1.bf16.msra.mxu0 0
    %581 = vmatprep.subr.bf16.mxu0 0
    %582 = vmatpush1.bf16.msra.mxu0 0
    %583 = vmatprep.subr.bf16.mxu0 0
    %584 = vmatpush1.bf16.msra.mxu0 0
    %585 = vmatprep.subr.bf16.mxu0 0
    %586 = vmatpush1.bf16.msra.mxu0 0
    %587 = vmatprep.subr.bf16.mxu0 0
    %588 = vmatpush1.bf16.msra.mxu0 0
    %589 = vmatprep.mubr.bf16.mxu0 0
    %590 = vmatmul.mubr.bf16.gmra.mrb[0].mxu0 %v552
    %v591 = vpop.f32.mrb[0].mxu0
    %v592 = vadd.f32 0.0, %v591
    %v593 = vpop.f32.mrb[0].mxu0
    %v594 = vpop.f32.mrb[0].mxu0
    %v595 = vpop.f32.mrb[0].mxu0
    %596 = vdwg.mxu0
    %v597 = vmul.f32 %v452, %v404
    %v598 = vmul.f32 %v498, %v405
    %v600 = vlaneseq
    %v601 = vshrl.u32 %v600, 7
    %v602 = vsub.s32 0, %v601
    %v603 = vrot.slane %v189, %v602
    %v605 = vadd.f32 %v597, %v603
    %v606 = vadd.f32 %v598, %v603
    %v607 = vmax.f32 %v605, 0.0
    %v608 = vmax.f32 %v606, 0.0
    %v609 = vadd.f32 %v607, %v243
    %v610 = vadd.f32 %v608, %v286
    %v611 = vmul.f32 %v546, %v406
    %v612 = vmul.f32 %v592, %v407
    %v614 = vlaneseq
    %v615 = vshrl.u32 %v614, 7
    %v616 = vsub.s32 0, %v615
    %v617 = vrot.slane %v190, %v616
    %v619 = vadd.f32 %v611, %v617
    %v620 = vadd.f32 %v612, %v617
    %v621 = vmax.f32 %v619, 0.0
    %v622 = vmax.f32 %v620, 0.0
    %v623 = vadd.f32 %v621, %v338
    %v624 = vadd.f32 %v622, %v378
    %v625 = vpack.c.bf16 %v609, %v609
    %v626 = vpack.c.bf16 %v610, %v610
    %v627 = vpack.c.bf16 %v623, %v623
    %v628 = vpack.c.bf16 %v624, %v624
    %v633 = vunpack.c.l.b16 %v185
    %v634 = vunpack.c.l.b16 %v186
    %v635 = vunpack.c.l.b16 %v187
    %v636 = vunpack.c.l.b16 %v188
    %v637 = vpack.c.b16 %v634, %v633
    %v638 = vpack.c.b16 %v636, %v635
    %v642 = vsel %vm204, %v627, 0
    %644 = vmatprep.subr.bf16.mxu0 0
    %645 = vmatpush1.bf16.msra.mxu0 %v637
    %646 = vmatprep.subr.bf16.mxu0 0
    %647 = vmatpush1.bf16.msra.mxu0 %v638
    %648 = vmatprep.subr.bf16.mxu0 0
    %649 = vmatpush1.bf16.msra.mxu0 0
    %650 = vmatprep.subr.bf16.mxu0 0
    %651 = vmatpush1.bf16.msra.mxu0 0
    %652 = vmatprep.subr.bf16.mxu0 0
    %653 = vmatpush1.bf16.msra.mxu0 0
    %654 = vmatprep.subr.bf16.mxu0 0
    %655 = vmatpush1.bf16.msra.mxu0 0
    %656 = vmatprep.subr.bf16.mxu0 0
    %657 = vmatpush1.bf16.msra.mxu0 0
    %658 = vmatprep.subr.bf16.mxu0 0
    %659 = vmatpush1.bf16.msra.mxu0 0
    %660 = vmatprep.subr.bf16.mxu0 0
    %661 = vmatpush1.bf16.msra.mxu0 0
    %662 = vmatprep.subr.bf16.mxu0 0
    %663 = vmatpush1.bf16.msra.mxu0 0
    %664 = vmatprep.subr.bf16.mxu0 0
    %665 = vmatpush1.bf16.msra.mxu0 0
    %666 = vmatprep.subr.bf16.mxu0 0
    %667 = vmatpush1.bf16.msra.mxu0 0
    %668 = vmatprep.subr.bf16.mxu0 0
    %669 = vmatpush1.bf16.msra.mxu0 0
    %670 = vmatprep.subr.bf16.mxu0 0
    %671 = vmatpush1.bf16.msra.mxu0 0
    %672 = vmatprep.subr.bf16.mxu0 0
    %673 = vmatpush1.bf16.msra.mxu0 0
    %674 = vmatprep.subr.bf16.mxu0 0
    %675 = vmatpush1.bf16.msra.mxu0 0
    %676 = vmatprep.mubr.bf16.mxu0 0
    %677 = vmatmul.mubr.bf16.gmra.mrb[0].mxu0 %v642
    %v678 = vpop.f32.mrb[0].mxu0
    %v679 = vadd.f32 0.0, %v678
    %v680 = vpop.f32.mrb[0].mxu0
    %v681 = vpop.f32.mrb[0].mxu0
    %v682 = vpop.f32.mrb[0].mxu0
    %683 = vdwg.mxu0
    %v685 = vsel %vm204, %v628, 0
    %687 = vmatprep.subr.bf16.mxu0 0
    %688 = vmatpush1.bf16.msra.mxu0 %v637
    %689 = vmatprep.subr.bf16.mxu0 0
    %690 = vmatpush1.bf16.msra.mxu0 %v638
    %691 = vmatprep.subr.bf16.mxu0 0
    %692 = vmatpush1.bf16.msra.mxu0 0
    %693 = vmatprep.subr.bf16.mxu0 0
    %694 = vmatpush1.bf16.msra.mxu0 0
    %695 = vmatprep.subr.bf16.mxu0 0
    %696 = vmatpush1.bf16.msra.mxu0 0
    %697 = vmatprep.subr.bf16.mxu0 0
    %698 = vmatpush1.bf16.msra.mxu0 0
    %699 = vmatprep.subr.bf16.mxu0 0
    %700 = vmatpush1.bf16.msra.mxu0 0
    %701 = vmatprep.subr.bf16.mxu0 0
    %702 = vmatpush1.bf16.msra.mxu0 0
    %703 = vmatprep.subr.bf16.mxu0 0
    %704 = vmatpush1.bf16.msra.mxu0 0
    %705 = vmatprep.subr.bf16.mxu0 0
    %706 = vmatpush1.bf16.msra.mxu0 0
    %707 = vmatprep.subr.bf16.mxu0 0
    %708 = vmatpush1.bf16.msra.mxu0 0
    %709 = vmatprep.subr.bf16.mxu0 0
    %710 = vmatpush1.bf16.msra.mxu0 0
    %711 = vmatprep.subr.bf16.mxu0 0
    %712 = vmatpush1.bf16.msra.mxu0 0
    %713 = vmatprep.subr.bf16.mxu0 0
    %714 = vmatpush1.bf16.msra.mxu0 0
    %715 = vmatprep.subr.bf16.mxu0 0
    %716 = vmatpush1.bf16.msra.mxu0 0
    %717 = vmatprep.subr.bf16.mxu0 0
    %718 = vmatpush1.bf16.msra.mxu0 0
    %719 = vmatprep.mubr.bf16.mxu0 0
    %720 = vmatmul.mubr.bf16.gmra.mrb[0].mxu0 %v685
    %v721 = vpop.f32.mrb[0].mxu0
    %v722 = vadd.f32 0.0, %v721
    %v723 = vpop.f32.mrb[0].mxu0
    %v724 = vpop.f32.mrb[0].mxu0
    %v725 = vpop.f32.mrb[0].mxu0
    %726 = vdwg.mxu0
    %v731 = vunpack.c.l.b16 %v181
    %v732 = vunpack.c.l.b16 %v182
    %v733 = vunpack.c.l.b16 %v183
    %v734 = vunpack.c.l.b16 %v184
    %v735 = vpack.c.b16 %v732, %v731
    %v736 = vpack.c.b16 %v734, %v733
    %v740 = vsel %vm204, %v625, 0
    %742 = vmatprep.subr.bf16.mxu0 0
    %743 = vmatpush1.bf16.msra.mxu0 %v735
    %744 = vmatprep.subr.bf16.mxu0 0
    %745 = vmatpush1.bf16.msra.mxu0 %v736
    %746 = vmatprep.subr.bf16.mxu0 0
    %747 = vmatpush1.bf16.msra.mxu0 0
    %748 = vmatprep.subr.bf16.mxu0 0
    %749 = vmatpush1.bf16.msra.mxu0 0
    %750 = vmatprep.subr.bf16.mxu0 0
    %751 = vmatpush1.bf16.msra.mxu0 0
    %752 = vmatprep.subr.bf16.mxu0 0
    %753 = vmatpush1.bf16.msra.mxu0 0
    %754 = vmatprep.subr.bf16.mxu0 0
    %755 = vmatpush1.bf16.msra.mxu0 0
    %756 = vmatprep.subr.bf16.mxu0 0
    %757 = vmatpush1.bf16.msra.mxu0 0
    %758 = vmatprep.subr.bf16.mxu0 0
    %759 = vmatpush1.bf16.msra.mxu0 0
    %760 = vmatprep.subr.bf16.mxu0 0
    %761 = vmatpush1.bf16.msra.mxu0 0
    %762 = vmatprep.subr.bf16.mxu0 0
    %763 = vmatpush1.bf16.msra.mxu0 0
    %764 = vmatprep.subr.bf16.mxu0 0
    %765 = vmatpush1.bf16.msra.mxu0 0
    %766 = vmatprep.subr.bf16.mxu0 0
    %767 = vmatpush1.bf16.msra.mxu0 0
    %768 = vmatprep.subr.bf16.mxu0 0
    %769 = vmatpush1.bf16.msra.mxu0 0
    %770 = vmatprep.subr.bf16.mxu0 0
    %771 = vmatpush1.bf16.msra.mxu0 0
    %772 = vmatprep.subr.bf16.mxu0 0
    %773 = vmatpush1.bf16.msra.mxu0 0
    %774 = vmatprep.mubr.bf16.mxu0 0
    %775 = vmatmul.mubr.bf16.gmra.mrb[0].mxu0 %v740
    %v776 = vpop.f32.mrb[0].mxu0
    %v777 = vadd.f32 %v679, %v776
    %v778 = vpop.f32.mrb[0].mxu0
    %v779 = vpop.f32.mrb[0].mxu0
    %v780 = vpop.f32.mrb[0].mxu0
    %781 = vdwg.mxu0
    %v783 = vsel %vm204, %v626, 0
    %785 = vmatprep.subr.bf16.mxu0 0
    %786 = vmatpush1.bf16.msra.mxu0 %v735
    %787 = vmatprep.subr.bf16.mxu0 0
    %788 = vmatpush1.bf16.msra.mxu0 %v736
    %789 = vmatprep.subr.bf16.mxu0 0
    %790 = vmatpush1.bf16.msra.mxu0 0
    %791 = vmatprep.subr.bf16.mxu0 0
    %792 = vmatpush1.bf16.msra.mxu0 0
    %793 = vmatprep.subr.bf16.mxu0 0
    %794 = vmatpush1.bf16.msra.mxu0 0
    %795 = vmatprep.subr.bf16.mxu0 0
    %796 = vmatpush1.bf16.msra.mxu0 0
    %797 = vmatprep.subr.bf16.mxu0 0
    %798 = vmatpush1.bf16.msra.mxu0 0
    %799 = vmatprep.subr.bf16.mxu0 0
    %800 = vmatpush1.bf16.msra.mxu0 0
    %801 = vmatprep.subr.bf16.mxu0 0
    %802 = vmatpush1.bf16.msra.mxu0 0
    %803 = vmatprep.subr.bf16.mxu0 0
    %804 = vmatpush1.bf16.msra.mxu0 0
    %805 = vmatprep.subr.bf16.mxu0 0
    %806 = vmatpush1.bf16.msra.mxu0 0
    %807 = vmatprep.subr.bf16.mxu0 0
    %808 = vmatpush1.bf16.msra.mxu0 0
    %809 = vmatprep.subr.bf16.mxu0 0
    %810 = vmatpush1.bf16.msra.mxu0 0
    %811 = vmatprep.subr.bf16.mxu0 0
    %812 = vmatpush1.bf16.msra.mxu0 0
    %813 = vmatprep.subr.bf16.mxu0 0
    %814 = vmatpush1.bf16.msra.mxu0 0
    %815 = vmatprep.subr.bf16.mxu0 0
    %816 = vmatpush1.bf16.msra.mxu0 0
    %817 = vmatprep.mubr.bf16.mxu0 0
    %818 = vmatmul.mubr.bf16.gmra.mrb[0].mxu0 %v783
    %v819 = vpop.f32.mrb[0].mxu0
    %v820 = vadd.f32 %v722, %v819
    %v821 = vpop.f32.mrb[0].mxu0
    %v822 = vpop.f32.mrb[0].mxu0
    %v823 = vpop.f32.mrb[0].mxu0
    %824 = vdwg.mxu0
    %v826 = vlaneseq
    %v827 = vshrl.u32 %v826, 7
    %v828 = vsub.s32 0, %v827
    %v829 = vrot.slane %v191, %v828
    %v831 = vadd.f32 %v777, %v829
    %v832 = vadd.f32 %v820, %v829
    %833 = vst.msk [vmem:[#allocation19] sm:$0xff] %vm204, %v831
    %834 = vst.msk [vmem:[#allocation19 + $0x8] sm:$0xff] %vm204, %v832
    // Predicated region
    $region82: #{tpu_custom_call.1} parent=1 // pred_check
      _
    $region83: #{tpu_custom_call.1} parent=1 // pred_check_branch
      %836 = sbr.rel (0) target = $region85
    $region84: #{tpu_custom_call.1} parent=1 // pred_region
      %s838 = ssub.s32 256, 256
      %839 = vsyncadd [#allocation4], %s838
      %s840 = sshll.u32 [#allocation19], 4
      %s841 = int_to_ptr.vmem [resolvable:$true] %s840
      %846 = dma.vmem_to_hbm [thread:$0]  %s841, 256, %s10, [#allocation4], 128, 128, 8
    $region85: #{tpu_custom_call.1} parent=1 // pred_fallthru
      _
    // Predicated region
    $region86: #{tpu_custom_call.1} parent=1 // pred_check
      _
    $region87: #{tpu_custom_call.1} parent=1 // pred_check_branch
      %848 = sbr.rel (0) target = $region89
    $region88: #{tpu_custom_call.1} parent=1 // pred_region
      %849 = dma.done [#allocation4], 256
    $region89: #{tpu_custom_call.1} parent=1 // pred_fallthru
      _
    %850 = vsyncpa [#allocation3], 1
    %851 = vsyncpa [#allocation6], 1
    %852 = vsyncpa [#allocation9], 1
    %853 = vsyncpa [#allocation12], 1
    %854 = vsyncpa [#allocation15], 1
    %855 = vsyncpa [#allocation18], 1
    %856 = vsyncpa [#allocation4], 1

</llo_original>
